<compile_context>
chip_gen: v7x
topology: tpu7x:2x2x1
jax: 0.10.0
libtpu: 0.0.40
codegen_flags: <defaults>
</compile_context>

<pallas_src>
import jax
import jax.numpy as jnp
from jax.experimental import pallas as pl
from jax.experimental.pallas import tpu as pltpu


_PACK = 16  # batch rows folded into one lane row on the packed fast path


def _round_up(x, m):
    return -(-x // m) * m


def _mlp_kernel(x_ref, w1_ref, b1_ref, w2_ref, b2_ref, o_ref):
    # fc1 + ReLU on one batch tile (f32 accumulation on the MXU).
    h = jnp.dot(x_ref[...], w1_ref[...], preferred_element_type=jnp.float32)
    h = jnp.maximum(h + b1_ref[...], 0.0)
    # fc2.
    out = jnp.dot(h, w2_ref[...], preferred_element_type=jnp.float32)
    o_ref[...] = (out + b2_ref[...]).astype(o_ref.dtype)


def _block_diag(w, n):
    """[din, dout] -> [n*din, n*dout] block-diagonal with n copies of w."""
    din, dout = w.shape
    eye = jnp.eye(n, dtype=w.dtype)
    return (eye[:, None, :, None] * w[None, :, None, :]).reshape(n * din, n * dout)


def _run(x, w1, b1, w2, b2, out_cols, tile_rows, cost):
    rows, feat = x.shape
    grid = (pl.cdiv(rows, tile_rows),)
    return pl.pallas_call(
        _mlp_kernel,
        out_shape=jax.ShapeDtypeStruct((rows, out_cols), jnp.float32),
        grid=grid,
        in_specs=[
            # x: one batch tile per grid step (auto double-buffered; partial
            # last block handled by Pallas, no wrapper-side padding).
            pl.BlockSpec((tile_rows, feat), lambda i: (i, 0)),
            # Weights/biases: constant index_map -> resident in VMEM.
            pl.BlockSpec(w1.shape, lambda i: (0, 0)),
            pl.BlockSpec(b1.shape, lambda i: (0, 0)),
            pl.BlockSpec(w2.shape, lambda i: (0, 0)),
            pl.BlockSpec(b2.shape, lambda i: (0, 0)),
        ],
        out_specs=pl.BlockSpec((tile_rows, out_cols), lambda i: (i, 0)),
        compiler_params=pltpu.CompilerParams(
            # Independent batch tiles -> parallel (2 TCs on v7x; neutral on
            # v5e/v6e).  Raise scoped VMEM for v5e's 16 MiB default.
            dimension_semantics=("parallel",),
            vmem_limit_bytes=32 * 1024 * 1024,
        ),
        cost_estimate=cost,
    )(x, w1, b1, w2, b2)


def race_classifier_forward(x, w1, b1, w2, b2, *, tm=8192):
    """Forward of RaceClassifier.

    x:  [B, D]
    w1: [D, 16], b1: [1, 16], w2: [16, C], b2: [1, C]  (weights pre-transposed
    to [in, out]).  Returns [B, C] float32.
    `tm` is the target batch-row tile (multiple of 8; internally capped so the
    grid has >= 2 steps for large B).
    """
    B, D = x.shape
    H = w1.shape[1]
    C = w2.shape[1]
    bytes_in = int(x.dtype.itemsize)

    packed_ok = (B >= _PACK) and (B % _PACK == 0) and ((_PACK * C) % 128 == 0)

    if packed_ok:
        # ---- lane-dense packed path -------------------------------------
        Bp = B // _PACK
        xp = x.reshape(Bp, _PACK * D)              # free contiguous reshape
        w1p = _block_diag(w1, _PACK)               # [16D, 16H]
        b1p = jnp.tile(b1, (1, _PACK))             # [1, 16H]
        w2p = _block_diag(w2, _PACK)               # [16H, 16C]
        b2p = jnp.tile(b2, (1, _PACK))             # [1, 16C] (= 128 lanes)

        if Bp <= 8:
            tile = Bp
        else:
            tile = max(8, min(_round_up(tm, 8 * _PACK) // _PACK,
                              _round_up(pl.cdiv(Bp, 2), 8)))

        cost = pl.CostEstimate(
            flops=2 * Bp * _PACK * _PACK * (D * H + H * C),  # 16x redundant, honest
            transcendentals=0,
            bytes_accessed=(B * D + _PACK * _PACK * (D * H + H * C)) * bytes_in
            + (_PACK * (H + C) + B * C) * 4,
        )
        out = _run(xp, w1p, b1p, w2p, b2p, _PACK * C, tile, cost)
        return out.reshape(B, C)                   # free contiguous reshape

    # ---- general fallback (B not a multiple of 16) -----------------------
    if B <= 8:
        tile = B
    else:
        tile = max(8, min(_round_up(tm, 8), _round_up(pl.cdiv(B, 2), 8)))

    cost = pl.CostEstimate(
        flops=2 * B * (D * H + H * C),
        transcendentals=0,
        bytes_accessed=(B * D + D * H + H * C) * bytes_in + (H + C + B * C) * 4,
    )
    return _run(x, w1, b1, w2, b2, C, tile, cost)


if __name__ == "__main__":
    INPUT_SIZE, HIDDEN, NUM_CLASSES = 32, 16, 8

    key = jax.random.PRNGKey(0)
    kx, k1, k2, k3, k4 = jax.random.split(key, 5)

    # Deterministic parameters (nn.Linear shapes, stored transposed [in, out]).
    w1 = jax.random.normal(k1, (INPUT_SIZE, HIDDEN), dtype=jnp.float32) * 0.1
    b1 = jax.random.normal(k2, (1, HIDDEN), dtype=jnp.float32) * 0.1
    w2 = jax.random.normal(k3, (HIDDEN, NUM_CLASSES), dtype=jnp.float32) * 0.1
    b2 = jax.random.normal(k4, (1, NUM_CLASSES), dtype=jnp.float32) * 0.1

    def ref(x):
        return jnp.maximum(x @ w1 + b1, 0.0) @ w2 + b2

    # Packed lane-dense path (B % 16 == 0).
    x64 = jax.random.normal(kx, (64, INPUT_SIZE), dtype=jnp.float32)
    out64 = jax.block_until_ready(race_classifier_forward(x64, w1, b1, w2, b2))
    assert out64.shape == (64, NUM_CLASSES)
    assert jnp.allclose(out64, ref(x64), atol=1e-5, rtol=1e-5)

    # General fallback: B=40 (not a multiple of 16) -> tile=24, grid=(2,),
    # partial last block handled by Pallas (no wrapper-side padding).
    x40 = jax.random.normal(kx, (40, INPUT_SIZE), dtype=jnp.float32)
    out40 = jax.block_until_ready(race_classifier_forward(x40, w1, b1, w2, b2))
    assert out40.shape == (40, NUM_CLASSES)
    assert jnp.allclose(out40, ref(x40), atol=1e-5, rtol=1e-5)

    print("KERNEL_OK")
</pallas_src>

<mosaic_0001>
module attributes {stable_mosaic.version = 11 : i64} {
  func.func @_mlp_kernel(%arg0: i32, %arg1: memref<4x512xf32, #tpu.memory_space<vmem>>, %arg2: memref<512x256xf32, #tpu.memory_space<vmem>>, %arg3: memref<1x256xf32, #tpu.memory_space<vmem>>, %arg4: memref<256x128xf32, #tpu.memory_space<vmem>>, %arg5: memref<1x128xf32, #tpu.memory_space<vmem>>, %arg6: memref<4x128xf32, #tpu.memory_space<vmem>>) attributes {dimension_semantics = [#tpu.dimension_semantics<parallel>], iteration_bounds = array<i64: 1>, scalar_prefetch = 0 : i64, scratch_operands = 0 : i64, tpu.core_type = #tpu.core_type<tc>, window_params = [{transform_indices = @transform_0, window_bounds = array<i64: 4, 512>}, {pipeline_mode = #tpu.pipeline_mode<synchronous>, transform_indices = @transform_1, window_bounds = array<i64: 512, 256>}, {pipeline_mode = #tpu.pipeline_mode<synchronous>, transform_indices = @transform_2, window_bounds = array<i64: 1, 256>}, {pipeline_mode = #tpu.pipeline_mode<synchronous>, transform_indices = @transform_3, window_bounds = array<i64: 256, 128>}, {pipeline_mode = #tpu.pipeline_mode<synchronous>, transform_indices = @transform_4, window_bounds = array<i64: 1, 128>}, {transform_indices = @transform_5, window_bounds = array<i64: 4, 128>}]} {
    %c0 = arith.constant 0 : index
    %c0_0 = arith.constant 0 : index
    %0 = vector.load %arg1[%c0, %c0_0] : memref<4x512xf32, #tpu.memory_space<vmem>>, vector<4x512xf32>
    %c0_1 = arith.constant 0 : index
    %c0_2 = arith.constant 0 : index
    %1 = vector.load %arg2[%c0_1, %c0_2] : memref<512x256xf32, #tpu.memory_space<vmem>>, vector<512x256xf32>
    %cst = arith.constant dense<0.000000e+00> : vector<4x256xf32>
    %2 = tpu.matmul %0, %1, %cst {dimension_numbers = #tpu.dot_dimension_numbers<[1], [0], [0], [1], [0, 0, 1, 1], [], []>} : vector<4x512xf32>, vector<512x256xf32>, vector<4x256xf32> -> vector<4x256xf32>
    %c0_3 = arith.constant 0 : index
    %c0_4 = arith.constant 0 : index
    %3 = vector.load %arg3[%c0_3, %c0_4] : memref<1x256xf32, #tpu.memory_space<vmem>>, vector<1x256xf32>
    %4 = vector.broadcast %3 : vector<1x256xf32> to vector<4x256xf32>
    %5 = arith.addf %2, %4 : vector<4x256xf32>
    %cst_5 = arith.constant 0.000000e+00 : f32
    %6 = vector.broadcast %cst_5 : f32 to vector<4x256xf32>
    %7 = arith.maximumf %5, %6 : vector<4x256xf32>
    %c0_6 = arith.constant 0 : index
    %c0_7 = arith.constant 0 : index
    %8 = vector.load %arg4[%c0_6, %c0_7] : memref<256x128xf32, #tpu.memory_space<vmem>>, vector<256x128xf32>
    %cst_8 = arith.constant dense<0.000000e+00> : vector<4x128xf32>
    %9 = tpu.matmul %7, %8, %cst_8 {dimension_numbers = #tpu.dot_dimension_numbers<[1], [0], [0], [1], [0, 0, 1, 1], [], []>} : vector<4x256xf32>, vector<256x128xf32>, vector<4x128xf32> -> vector<4x128xf32>
    %c0_9 = arith.constant 0 : index
    %c0_10 = arith.constant 0 : index
    %10 = vector.load %arg5[%c0_9, %c0_10] : memref<1x128xf32, #tpu.memory_space<vmem>>, vector<1x128xf32>
    %11 = vector.broadcast %10 : vector<1x128xf32> to vector<4x128xf32>
    %12 = arith.addf %9, %11 : vector<4x128xf32>
    %c0_11 = arith.constant 0 : index
    %c0_12 = arith.constant 0 : index
    %13 = vector.load %arg6[%c0_11, %c0_12] : memref<4x128xf32, #tpu.memory_space<vmem>>, vector<4x128xf32>
    tpu.vector_store %arg6[%c0_11, %c0_12], %12 {strides = array<i32>} : memref<4x128xf32, #tpu.memory_space<vmem>>, vector<4x128xf32>,
    return
  }
  func.func @transform_0(%arg0: i32) -> (i32, i32) {
    %c0_i32 = arith.constant 0 : i32
    %c0_i32_0 = arith.constant 0 : i32
    return %arg0, %c0_i32 : i32, i32
  }
  func.func @transform_1(%arg0: i32) -> (i32, i32) {
    %c0_i32 = arith.constant 0 : i32
    %c0_i32_0 = arith.constant 0 : i32
    %c0_i32_1 = arith.constant 0 : i32
    return %c0_i32, %c0_i32_0 : i32, i32
  }
  func.func @transform_2(%arg0: i32) -> (i32, i32) {
    %c0_i32 = arith.constant 0 : i32
    %c0_i32_0 = arith.constant 0 : i32
    %c0_i32_1 = arith.constant 0 : i32
    return %c0_i32, %c0_i32_0 : i32, i32
  }
  func.func @transform_3(%arg0: i32) -> (i32, i32) {
    %c0_i32 = arith.constant 0 : i32
    %c0_i32_0 = arith.constant 0 : i32
    %c0_i32_1 = arith.constant 0 : i32
    return %c0_i32, %c0_i32_0 : i32, i32
  }
  func.func @transform_4(%arg0: i32) -> (i32, i32) {
    %c0_i32 = arith.constant 0 : i32
    %c0_i32_0 = arith.constant 0 : i32
    %c0_i32_1 = arith.constant 0 : i32
    return %c0_i32, %c0_i32_0 : i32, i32
  }
  func.func @transform_5(%arg0: i32) -> (i32, i32) {
    %c0_i32 = arith.constant 0 : i32
    %c0_i32_0 = arith.constant 0 : i32
    return %arg0, %c0_i32 : i32, i32
  }
}

</mosaic_0001>

<llo_original>
// kernel: tpu_custom_call.1
$region0: #{tpu_custom_call.1}
  #allocation0 [shape = 'u32[]', space=smem, size = 0x4, offset = 0x4, fixed_abs, tag = 'smem constant byte address 0x4 - core index']
  #allocation1 [shape = 'u32[144,128]{1,0:T(1,128)}', space=vmem, size = 0x12000, scoped, tag = 'internal scratch']
  %s0 = inlined_call_operand.hbm [shape: f32[4,512], index: 0, kind: input, shape index: {}]
  %s1 = inlined_call_operand.hbm [shape: f32[512,256], index: 1, kind: input, shape index: {}]
  %s2 = inlined_call_operand.vmem [shape: f32[1,256], index: 2, kind: input, shape index: {}]
  %s3 = inlined_call_operand.hbm [shape: f32[256,128], index: 3, kind: input, shape index: {}]
  %s4 = inlined_call_operand.vmem [shape: f32[1,128], index: 4, kind: input, shape index: {}]
  %s5 = inlined_call_operand.hbm [shape: f32[4,128], index: 5, kind: output, shape index: {}]
  %s6 = sld [smem:[#allocation0]]
  $region42: #{tpu_custom_call.1} parent=0
    _
  %s8 = ssub.s32 1, %s6
  %s9 = scalar_select 0, %s8, %s6
  $region1: #{tpu_custom_call.1} parent=0
    #allocation2 [shape = 'u8[8192]{0}', space=vmem, size = 0x2000, scoped, tag = 'input window, operand 0, single buffered']
    #allocation3 [shape = 's32[1]{0}', space=sflag, size = 0x4, scoped, tag = 'scoped memory for tpu_custom_call.1']
    #allocation4 [shape = 's32[1]{0}', space=sflag, size = 0x4, scoped, tag = 'scoped memory for tpu_custom_call.1']
    #allocation5 [shape = 'u8[524288]{0}', space=vmem, size = 0x80000, scoped, tag = 'input window, operand 1, single buffered']
    #allocation6 [shape = 's32[1]{0}', space=sflag, size = 0x4, scoped, tag = 'scoped memory for tpu_custom_call.1']
    #allocation7 [shape = 'u8[131072]{0}', space=vmem, size = 0x20000, scoped, tag = 'input window, operand 3, single buffered']
    #allocation8 [shape = 'u8[2048]{0}', space=vmem, size = 0x800, scoped, tag = 'output window, operand 0, single buffered']
    %10 = vsyncpa [#allocation3], 0
    %11 = vsyncpa [#allocation6], 0
    %12 = vsyncpa [#allocation4], 0
    // Predicated region
    $region2: #{tpu_custom_call.1} parent=1 // pred_check
      _
    $region3: #{tpu_custom_call.1} parent=1 // pred_check_branch
      %14 = sbr.rel (0) target = $region5
    $region4: #{tpu_custom_call.1} parent=1 // pred_region
      %s16 = ssub.s32 256, 256
      %17 = vsyncadd [#allocation3], %s16
      %s19 = sshll.u32 [#allocation2], 4
      %s20 = int_to_ptr.vmem [resolvable:$true] %s19
      %22 = dma.hbm_to_vmem [thread:$0]  %s0, 256, %s20, [#allocation3]
    $region5: #{tpu_custom_call.1} parent=1 // pred_fallthru
      _
    // Predicated region
    $region6: #{tpu_custom_call.1} parent=1 // pred_check
      _
    $region7: #{tpu_custom_call.1} parent=1 // pred_check_branch
      %24 = sbr.rel (0) target = $region9
    $region8: #{tpu_custom_call.1} parent=1 // pred_region
      %s26 = ssub.s32 16384, 16384
      %27 = vsyncadd [#allocation6], %s26
      %s28 = sshll.u32 [#allocation5], 4
      %s29 = int_to_ptr.vmem [resolvable:$true] %s28
      %34 = dma.hbm_to_vmem [thread:$0]  %s1, 16384, %s29, [#allocation6], 256, 256, 16
    $region9: #{tpu_custom_call.1} parent=1 // pred_fallthru
      _
    // Predicated region
    $region10: #{tpu_custom_call.1} parent=1 // pred_check
      _
    $region11: #{tpu_custom_call.1} parent=1 // pred_check_branch
      %36 = sbr.rel (0) target = $region13
    $region12: #{tpu_custom_call.1} parent=1 // pred_region
      _
    $region13: #{tpu_custom_call.1} parent=1 // pred_fallthru
      _
    // Predicated region
    $region14: #{tpu_custom_call.1} parent=1 // pred_check
      _
    $region15: #{tpu_custom_call.1} parent=1 // pred_check_branch
      %38 = sbr.rel (0) target = $region17
    $region16: #{tpu_custom_call.1} parent=1 // pred_region
      %s40 = ssub.s32 4096, 4096
      %41 = vsyncadd [#allocation6], %s40
      %s42 = sshll.u32 [#allocation7], 4
      %s43 = int_to_ptr.vmem [resolvable:$true] %s42
      %48 = dma.hbm_to_vmem [thread:$0]  %s3, 4096, %s43, [#allocation6], 128, 128, 8
    $region17: #{tpu_custom_call.1} parent=1 // pred_fallthru
      _
    // Predicated region
    $region18: #{tpu_custom_call.1} parent=1 // pred_check
      _
    $region19: #{tpu_custom_call.1} parent=1 // pred_check_branch
      %50 = sbr.rel (0) target = $region21
    $region20: #{tpu_custom_call.1} parent=1 // pred_region
      _
    $region21: #{tpu_custom_call.1} parent=1 // pred_fallthru
      _
    // Predicated region
    $region22: #{tpu_custom_call.1} parent=1 // pred_check
      _
    $region23: #{tpu_custom_call.1} parent=1 // pred_check_branch
      %52 = sbr.rel (0) target = $region25
    $region24: #{tpu_custom_call.1} parent=1 // pred_region
      %53 = dma.done [#allocation3], 256
    $region25: #{tpu_custom_call.1} parent=1 // pred_fallthru
      _
    // Predicated region
    $region26: #{tpu_custom_call.1} parent=1 // pred_check
      _
    $region27: #{tpu_custom_call.1} parent=1 // pred_check_branch
      %55 = sbr.rel (0) target = $region29
    $region28: #{tpu_custom_call.1} parent=1 // pred_region
      %56 = dma.done [#allocation6], 16384
    $region29: #{tpu_custom_call.1} parent=1 // pred_fallthru
      _
    // Predicated region
    $region30: #{tpu_custom_call.1} parent=1 // pred_check
      _
    $region31: #{tpu_custom_call.1} parent=1 // pred_check_branch
      %58 = sbr.rel (0) target = $region33
    $region32: #{tpu_custom_call.1} parent=1 // pred_region
      %59 = dma.done [#allocation6], 4096
    $region33: #{tpu_custom_call.1} parent=1 // pred_fallthru
      _
    %v60 = vld [vmem:[#allocation2] sm:$0xff]
    %v61 = vld [vmem:[#allocation2 + $0x8] sm:$0xff]
    %v62 = vld [vmem:[#allocation5] sm:$0xff]
    %v63 = vld [vmem:[#allocation5 + $0x8] sm:$0xff]
    %v64 = vld [vmem:[#allocation5 + $0x10] sm:$0xff]
    %v65 = vld [vmem:[#allocation5 + $0x18] sm:$0xff]
    %v66 = vld [vmem:[#allocation5 + $0x20] sm:$0xff]
    %v67 = vld [vmem:[#allocation5 + $0x28] sm:$0xff]
    %v68 = vld [vmem:[#allocation5 + $0x30] sm:$0xff]
    %v69 = vld [vmem:[#allocation5 + $0x38] sm:$0xff]
    %v70 = vld [vmem:[#allocation5 + $0x40] sm:$0xff]
    %v71 = vld [vmem:[#allocation5 + $0x48] sm:$0xff]
    %v72 = vld [vmem:[#allocation5 + $0x50] sm:$0xff]
    %v73 = vld [vmem:[#allocation5 + $0x58] sm:$0xff]
    %v74 = vld [vmem:[#allocation5 + $0x60] sm:$0xff]
    %v75 = vld [vmem:[#allocation5 + $0x68] sm:$0xff]
    %v76 = vld [vmem:[#allocation5 + $0x70] sm:$0xff]
    %v77 = vld [vmem:[#allocation5 + $0x78] sm:$0xff]
    %v78 = vld [vmem:[#allocation5 + $0x80] sm:$0xff]
    %v79 = vld [vmem:[#allocation5 + $0x88] sm:$0xff]
    %v80 = vld [vmem:[#allocation5 + $0x90] sm:$0xff]
    %v81 = vld [vmem:[#allocation5 + $0x98] sm:$0xff]
    %v82 = vld [vmem:[#allocation5 + $0xa0] sm:$0xff]
    %v83 = vld [vmem:[#allocation5 + $0xa8] sm:$0xff]
    %v84 = vld [vmem:[#allocation5 + $0xb0] sm:$0xff]
    %v85 = vld [vmem:[#allocation5 + $0xb8] sm:$0xff]
    %v86 = vld [vmem:[#allocation5 + $0xc0] sm:$0xff]
    %v87 = vld [vmem:[#allocation5 + $0xc8] sm:$0xff]
    %v88 = vld [vmem:[#allocation5 + $0xd0] sm:$0xff]
    %v89 = vld [vmem:[#allocation5 + $0xd8] sm:$0xff]
    %v90 = vld [vmem:[#allocation5 + $0xe0] sm:$0xff]
    %v91 = vld [vmem:[#allocation5 + $0xe8] sm:$0xff]
    %v92 = vld [vmem:[#allocation5 + $0xf0] sm:$0xff]
    %v93 = vld [vmem:[#allocation5 + $0xf8] sm:$0xff]
    %v94 = vld [vmem:[#allocation5 + $0x100] sm:$0xff]
    %v95 = vld [vmem:[#allocation5 + $0x108] sm:$0xff]
    %v96 = vld [vmem:[#allocation5 + $0x110] sm:$0xff]
    %v97 = vld [vmem:[#allocation5 + $0x118] sm:$0xff]
    %v98 = vld [vmem:[#allocation5 + $0x120] sm:$0xff]
    %v99 = vld [vmem:[#allocation5 + $0x128] sm:$0xff]
    %v100 = vld [vmem:[#allocation5 + $0x130] sm:$0xff]
    %v101 = vld [vmem:[#allocation5 + $0x138] sm:$0xff]
    %v102 = vld [vmem:[#allocation5 + $0x140] sm:$0xff]
    %v103 = vld [vmem:[#allocation5 + $0x148] sm:$0xff]
    %v104 = vld [vmem:[#allocation5 + $0x150] sm:$0xff]
    %v105 = vld [vmem:[#allocation5 + $0x158] sm:$0xff]
    %v106 = vld [vmem:[#allocation5 + $0x160] sm:$0xff]
    %v107 = vld [vmem:[#allocation5 + $0x168] sm:$0xff]
    %v108 = vld [vmem:[#allocation5 + $0x170] sm:$0xff]
    %v109 = vld [vmem:[#allocation5 + $0x178] sm:$0xff]
    %v110 = vld [vmem:[#allocation5 + $0x180] sm:$0xff]
    %v111 = vld [vmem:[#allocation5 + $0x188] sm:$0xff]
    %v112 = vld [vmem:[#allocation5 + $0x190] sm:$0xff]
    %v113 = vld [vmem:[#allocation5 + $0x198] sm:$0xff]
    %v114 = vld [vmem:[#allocation5 + $0x1a0] sm:$0xff]
    %v115 = vld [vmem:[#allocation5 + $0x1a8] sm:$0xff]
    %v116 = vld [vmem:[#allocation5 + $0x1b0] sm:$0xff]
    %v117 = vld [vmem:[#allocation5 + $0x1b8] sm:$0xff]
    %v118 = vld [vmem:[#allocation5 + $0x1c0] sm:$0xff]
    %v119 = vld [vmem:[#allocation5 + $0x1c8] sm:$0xff]
    %v120 = vld [vmem:[#allocation5 + $0x1d0] sm:$0xff]
    %v121 = vld [vmem:[#allocation5 + $0x1d8] sm:$0xff]
    %v122 = vld [vmem:[#allocation5 + $0x1e0] sm:$0xff]
    %v123 = vld [vmem:[#allocation5 + $0x1e8] sm:$0xff]
    %v124 = vld [vmem:[#allocation5 + $0x1f0] sm:$0xff]
    %v125 = vld [vmem:[#allocation5 + $0x1f8] sm:$0xff]
    %v126 = vld [vmem:[#allocation5 + $0x200] sm:$0xff]
    %v127 = vld [vmem:[#allocation5 + $0x208] sm:$0xff]
    %v128 = vld [vmem:[#allocation5 + $0x210] sm:$0xff]
    %v129 = vld [vmem:[#allocation5 + $0x218] sm:$0xff]
    %v130 = vld [vmem:[#allocation5 + $0x220] sm:$0xff]
    %v131 = vld [vmem:[#allocation5 + $0x228] sm:$0xff]
    %v132 = vld [vmem:[#allocation5 + $0x230] sm:$0xff]
    %v133 = vld [vmem:[#allocation5 + $0x238] sm:$0xff]
    %v134 = vld [vmem:[#allocation5 + $0x240] sm:$0xff]
    %v135 = vld [vmem:[#allocation5 + $0x248] sm:$0xff]
    %v136 = vld [vmem:[#allocation5 + $0x250] sm:$0xff]
    %v137 = vld [vmem:[#allocation5 + $0x258] sm:$0xff]
    %v138 = vld [vmem:[#allocation5 + $0x260] sm:$0xff]
    %v139 = vld [vmem:[#allocation5 + $0x268] sm:$0xff]
    %v140 = vld [vmem:[#allocation5 + $0x270] sm:$0xff]
    %v141 = vld [vmem:[#allocation5 + $0x278] sm:$0xff]
    %v142 = vld [vmem:[#allocation5 + $0x280] sm:$0xff]
    %v143 = vld [vmem:[#allocation5 + $0x288] sm:$0xff]
    %v144 = vld [vmem:[#allocation5 + $0x290] sm:$0xff]
    %v145 = vld [vmem:[#allocation5 + $0x298] sm:$0xff]
    %v146 = vld [vmem:[#allocation5 + $0x2a0] sm:$0xff]
    %v147 = vld [vmem:[#allocation5 + $0x2a8] sm:$0xff]
    %v148 = vld [vmem:[#allocation5 + $0x2b0] sm:$0xff]
    %v149 = vld [vmem:[#allocation5 + $0x2b8] sm:$0xff]
    %v150 = vld [vmem:[#allocation5 + $0x2c0] sm:$0xff]
    %v151 = vld [vmem:[#allocation5 + $0x2c8] sm:$0xff]
    %v152 = vld [vmem:[#allocation5 + $0x2d0] sm:$0xff]
    %v153 = vld [vmem:[#allocation5 + $0x2d8] sm:$0xff]
    %v154 = vld [vmem:[#allocation5 + $0x2e0] sm:$0xff]
    %v155 = vld [vmem:[#allocation5 + $0x2e8] sm:$0xff]
    %v156 = vld [vmem:[#allocation5 + $0x2f0] sm:$0xff]
    %v157 = vld [vmem:[#allocation5 + $0x2f8] sm:$0xff]
    %v158 = vld [vmem:[#allocation5 + $0x300] sm:$0xff]
    %v159 = vld [vmem:[#allocation5 + $0x308] sm:$0xff]
    %v160 = vld [vmem:[#allocation5 + $0x310] sm:$0xff]
    %v161 = vld [vmem:[#allocation5 + $0x318] sm:$0xff]
    %v162 = vld [vmem:[#allocation5 + $0x320] sm:$0xff]
    %v163 = vld [vmem:[#allocation5 + $0x328] sm:$0xff]
    %v164 = vld [vmem:[#allocation5 + $0x330] sm:$0xff]
    %v165 = vld [vmem:[#allocation5 + $0x338] sm:$0xff]
    %v166 = vld [vmem:[#allocation5 + $0x340] sm:$0xff]
    %v167 = vld [vmem:[#allocation5 + $0x348] sm:$0xff]
    %v168 = vld [vmem:[#allocation5 + $0x350] sm:$0xff]
    %v169 = vld [vmem:[#allocation5 + $0x358] sm:$0xff]
    %v170 = vld [vmem:[#allocation5 + $0x360] sm:$0xff]
    %v171 = vld [vmem:[#allocation5 + $0x368] sm:$0xff]
    %v172 = vld [vmem:[#allocation5 + $0x370] sm:$0xff]
    %v173 = vld [vmem:[#allocation5 + $0x378] sm:$0xff]
    %v174 = vld [vmem:[#allocation5 + $0x380] sm:$0xff]
    %v175 = vld [vmem:[#allocation5 + $0x388] sm:$0xff]
    %v176 = vld [vmem:[#allocation5 + $0x390] sm:$0xff]
    %v177 = vld [vmem:[#allocation5 + $0x398] sm:$0xff]
    %v178 = vld [vmem:[#allocation5 + $0x3a0] sm:$0xff]
    %v179 = vld [vmem:[#allocation5 + $0x3a8] sm:$0xff]
    %v180 = vld [vmem:[#allocation5 + $0x3b0] sm:$0xff]
    %v181 = vld [vmem:[#allocation5 + $0x3b8] sm:$0xff]
    %v182 = vld [vmem:[#allocation5 + $0x3c0] sm:$0xff]
    %v183 = vld [vmem:[#allocation5 + $0x3c8] sm:$0xff]
    %v184 = vld [vmem:[#allocation5 + $0x3d0] sm:$0xff]
    %v185 = vld [vmem:[#allocation5 + $0x3d8] sm:$0xff]
    %v186 = vld [vmem:[#allocation5 + $0x3e0] sm:$0xff]
    %v187 = vld [vmem:[#allocation5 + $0x3e8] sm:$0xff]
    %v188 = vld [vmem:[#allocation5 + $0x3f0] sm:$0xff]
    %v189 = vld [vmem:[#allocation5 + $0x3f8] sm:$0xff]
    %v190 = vld [vmem:[%s2] sm:$0x3]
    %v192 = vlaneseq
    %v193 = vshrl.u32 %v192, 7
    %v194 = vsub.s32 0, %v193
    %v195 = vrot.slane %v190, %v194
    %v196 = vlaneseq
    %v197 = vshrl.u32 %v196, 7
    %v198 = vsub.s32 1, %v197
    %v199 = vrot.slane %v190, %v198
    %v204 = vcombine.high %v60, %v60
    %v205 = vcombine.high %v61, %v61
    %208 = vmatprep.subr.mxu0 %v63
    %209 = vmatpush1.msra.mxu0 %v62
    %210 = vmatprep.subr.mxu0 %v65
    %211 = vmatpush1.msra.mxu0 %v64
    %212 = vmatprep.subr.mxu0 %v67
    %213 = vmatpush1.msra.mxu0 %v66
    %214 = vmatprep.subr.mxu0 %v69
    %215 = vmatpush1.msra.mxu0 %v68
    %216 = vmatprep.subr.mxu0 %v71
    %217 = vmatpush1.msra.mxu0 %v70
    %218 = vmatprep.subr.mxu0 %v73
    %219 = vmatpush1.msra.mxu0 %v72
    %220 = vmatprep.subr.mxu0 %v75
    %221 = vmatpush1.msra.mxu0 %v74
    %222 = vmatprep.subr.mxu0 %v77
    %223 = vmatpush1.msra.mxu0 %v76
    %224 = vmatprep.subr.mxu0 %v79
    %225 = vmatpush1.msra.mxu0 %v78
    %226 = vmatprep.subr.mxu0 %v81
    %227 = vmatpush1.msra.mxu0 %v80
    %228 = vmatprep.subr.mxu0 %v83
    %229 = vmatpush1.msra.mxu0 %v82
    %230 = vmatprep.subr.mxu0 %v85
    %231 = vmatpush1.msra.mxu0 %v84
    %232 = vmatprep.subr.mxu0 %v87
    %233 = vmatpush1.msra.mxu0 %v86
    %234 = vmatprep.subr.mxu0 %v89
    %235 = vmatpush1.msra.mxu0 %v88
    %236 = vmatprep.subr.mxu0 %v91
    %237 = vmatpush1.msra.mxu0 %v90
    %238 = vmatprep.subr.mxu0 %v93
    %239 = vmatpush1.msra.mxu0 %v92
    %240 = vmatprep.subr.mxu0 %v95
    %241 = vmatpush1.msra.mxu0 %v94
    %242 = vmatprep.subr.mxu0 %v97
    %243 = vmatpush1.msra.mxu0 %v96
    %244 = vmatprep.subr.mxu0 %v99
    %245 = vmatpush1.msra.mxu0 %v98
    %246 = vmatprep.subr.mxu0 %v101
    %247 = vmatpush1.msra.mxu0 %v100
    %248 = vmatprep.subr.mxu0 %v103
    %249 = vmatpush1.msra.mxu0 %v102
    %250 = vmatprep.subr.mxu0 %v105
    %251 = vmatpush1.msra.mxu0 %v104
    %252 = vmatprep.subr.mxu0 %v107
    %253 = vmatpush1.msra.mxu0 %v106
    %254 = vmatprep.subr.mxu0 %v109
    %255 = vmatpush1.msra.mxu0 %v108
    %256 = vmatprep.subr.mxu0 %v111
    %257 = vmatpush1.msra.mxu0 %v110
    %258 = vmatprep.subr.mxu0 %v113
    %259 = vmatpush1.msra.mxu0 %v112
    %260 = vmatprep.subr.mxu0 %v115
    %261 = vmatpush1.msra.mxu0 %v114
    %262 = vmatprep.subr.mxu0 %v117
    %263 = vmatpush1.msra.mxu0 %v116
    %264 = vmatprep.subr.mxu0 %v119
    %265 = vmatpush1.msra.mxu0 %v118
    %266 = vmatprep.subr.mxu0 %v121
    %267 = vmatpush1.msra.mxu0 %v120
    %268 = vmatprep.subr.mxu0 %v123
    %269 = vmatpush1.msra.mxu0 %v122
    %270 = vmatprep.subr.mxu0 %v125
    %271 = vmatpush1.msra.mxu0 %v124
    %272 = vmatprep.mubr.f32.mxu0 %v204
    %273 = vmatmul.mubr.f32.gmra.mrb[0].mxu0 %v60
    %v274 = vpop.f32.mrb[0].mxu0
    %v275 = vadd.f32 %v195, %v274
    %v276 = vpop.f32.mrb[0].mxu0
    %v277 = vadd.f32 %v199, %v276
    %278 = vdwg.mxu0
    %279 = vmatprep.subr.mxu0 %v127
    %280 = vmatpush1.msra.mxu0 %v126
    %281 = vmatprep.subr.mxu0 %v129
    %282 = vmatpush1.msra.mxu0 %v128
    %283 = vmatprep.subr.mxu0 %v131
    %284 = vmatpush1.msra.mxu0 %v130
    %285 = vmatprep.subr.mxu0 %v133
    %286 = vmatpush1.msra.mxu0 %v132
    %287 = vmatprep.subr.mxu0 %v135
    %288 = vmatpush1.msra.mxu0 %v134
    %289 = vmatprep.subr.mxu0 %v137
    %290 = vmatpush1.msra.mxu0 %v136
    %291 = vmatprep.subr.mxu0 %v139
    %292 = vmatpush1.msra.mxu0 %v138
    %293 = vmatprep.subr.mxu0 %v141
    %294 = vmatpush1.msra.mxu0 %v140
    %295 = vmatprep.subr.mxu0 %v143
    %296 = vmatpush1.msra.mxu0 %v142
    %297 = vmatprep.subr.mxu0 %v145
    %298 = vmatpush1.msra.mxu0 %v144
    %299 = vmatprep.subr.mxu0 %v147
    %300 = vmatpush1.msra.mxu0 %v146
    %301 = vmatprep.subr.mxu0 %v149
    %302 = vmatpush1.msra.mxu0 %v148
    %303 = vmatprep.subr.mxu0 %v151
    %304 = vmatpush1.msra.mxu0 %v150
    %305 = vmatprep.subr.mxu0 %v153
    %306 = vmatpush1.msra.mxu0 %v152
    %307 = vmatprep.subr.mxu0 %v155
    %308 = vmatpush1.msra.mxu0 %v154
    %309 = vmatprep.subr.mxu0 %v157
    %310 = vmatpush1.msra.mxu0 %v156
    %311 = vmatprep.subr.mxu0 %v159
    %312 = vmatpush1.msra.mxu0 %v158
    %313 = vmatprep.subr.mxu0 %v161
    %314 = vmatpush1.msra.mxu0 %v160
    %315 = vmatprep.subr.mxu0 %v163
    %316 = vmatpush1.msra.mxu0 %v162
    %317 = vmatprep.subr.mxu0 %v165
    %318 = vmatpush1.msra.mxu0 %v164
    %319 = vmatprep.subr.mxu0 %v167
    %320 = vmatpush1.msra.mxu0 %v166
    %321 = vmatprep.subr.mxu0 %v169
    %322 = vmatpush1.msra.mxu0 %v168
    %323 = vmatprep.subr.mxu0 %v171
    %324 = vmatpush1.msra.mxu0 %v170
    %325 = vmatprep.subr.mxu0 %v173
    %326 = vmatpush1.msra.mxu0 %v172
    %327 = vmatprep.subr.mxu0 %v175
    %328 = vmatpush1.msra.mxu0 %v174
    %329 = vmatprep.subr.mxu0 %v177
    %330 = vmatpush1.msra.mxu0 %v176
    %331 = vmatprep.subr.mxu0 %v179
    %332 = vmatpush1.msra.mxu0 %v178
    %333 = vmatprep.subr.mxu0 %v181
    %334 = vmatpush1.msra.mxu0 %v180
    %335 = vmatprep.subr.mxu0 %v183
    %336 = vmatpush1.msra.mxu0 %v182
    %337 = vmatprep.subr.mxu0 %v185
    %338 = vmatpush1.msra.mxu0 %v184
    %339 = vmatprep.subr.mxu0 %v187
    %340 = vmatpush1.msra.mxu0 %v186
    %341 = vmatprep.subr.mxu0 %v189
    %342 = vmatpush1.msra.mxu0 %v188
    %343 = vmatprep.mubr.f32.mxu0 %v205
    %344 = vmatmul.mubr.f32.gmra.mrb[0].mxu0 %v61
    %v345 = vpop.f32.mrb[0].mxu0
    %v346 = vadd.f32 %v275, %v345
    %v347 = vpop.f32.mrb[0].mxu0
    %v348 = vadd.f32 %v277, %v347
    %349 = vdwg.mxu0
    %v350 = vmax.f32 %v346, 0.0
    %v351 = vmax.f32 %v348, 0.0
    %v352 = vld [vmem:[#allocation7] sm:$0xff]
    %v353 = vld [vmem:[#allocation7 + $0x8] sm:$0xff]
    %v354 = vld [vmem:[#allocation7 + $0x10] sm:$0xff]
    %v355 = vld [vmem:[#allocation7 + $0x18] sm:$0xff]
    %v356 = vld [vmem:[#allocation7 + $0x20] sm:$0xff]
    %v357 = vld [vmem:[#allocation7 + $0x28] sm:$0xff]
    %v358 = vld [vmem:[#allocation7 + $0x30] sm:$0xff]
    %v359 = vld [vmem:[#allocation7 + $0x38] sm:$0xff]
    %v360 = vld [vmem:[#allocation7 + $0x40] sm:$0xff]
    %v361 = vld [vmem:[#allocation7 + $0x48] sm:$0xff]
    %v362 = vld [vmem:[#allocation7 + $0x50] sm:$0xff]
    %v363 = vld [vmem:[#allocation7 + $0x58] sm:$0xff]
    %v364 = vld [vmem:[#allocation7 + $0x60] sm:$0xff]
    %v365 = vld [vmem:[#allocation7 + $0x68] sm:$0xff]
    %v366 = vld [vmem:[#allocation7 + $0x70] sm:$0xff]
    %v367 = vld [vmem:[#allocation7 + $0x78] sm:$0xff]
    %v368 = vld [vmem:[#allocation7 + $0x80] sm:$0xff]
    %v369 = vld [vmem:[#allocation7 + $0x88] sm:$0xff]
    %v370 = vld [vmem:[#allocation7 + $0x90] sm:$0xff]
    %v371 = vld [vmem:[#allocation7 + $0x98] sm:$0xff]
    %v372 = vld [vmem:[#allocation7 + $0xa0] sm:$0xff]
    %v373 = vld [vmem:[#allocation7 + $0xa8] sm:$0xff]
    %v374 = vld [vmem:[#allocation7 + $0xb0] sm:$0xff]
    %v375 = vld [vmem:[#allocation7 + $0xb8] sm:$0xff]
    %v376 = vld [vmem:[#allocation7 + $0xc0] sm:$0xff]
    %v377 = vld [vmem:[#allocation7 + $0xc8] sm:$0xff]
    %v378 = vld [vmem:[#allocation7 + $0xd0] sm:$0xff]
    %v379 = vld [vmem:[#allocation7 + $0xd8] sm:$0xff]
    %v380 = vld [vmem:[#allocation7 + $0xe0] sm:$0xff]
    %v381 = vld [vmem:[#allocation7 + $0xe8] sm:$0xff]
    %v382 = vld [vmem:[#allocation7 + $0xf0] sm:$0xff]
    %v383 = vld [vmem:[#allocation7 + $0xf8] sm:$0xff]
    %v384 = vld [vmem:[%s4] sm:$0x1]
    %v386 = vlaneseq
    %v387 = vshrl.u32 %v386, 7
    %v388 = vsub.s32 0, %v387
    %v389 = vrot.slane %v384, %v388
    %391 = vmatprep.subr.mxu0 0.0
    %392 = vmatpush1.msra.mxu0 %v352
    %393 = vmatprep.subr.mxu0 0.0
    %394 = vmatpush1.msra.mxu0 %v353
    %395 = vmatprep.subr.mxu0 0.0
    %396 = vmatpush1.msra.mxu0 %v354
    %397 = vmatprep.subr.mxu0 0.0
    %398 = vmatpush1.msra.mxu0 %v355
    %399 = vmatprep.subr.mxu0 0.0
    %400 = vmatpush1.msra.mxu0 %v356
    %401 = vmatprep.subr.mxu0 0.0
    %402 = vmatpush1.msra.mxu0 %v357
    %403 = vmatprep.subr.mxu0 0.0
    %404 = vmatpush1.msra.mxu0 %v358
    %405 = vmatprep.subr.mxu0 0.0
    %406 = vmatpush1.msra.mxu0 %v359
    %407 = vmatprep.subr.mxu0 0.0
    %408 = vmatpush1.msra.mxu0 %v360
    %409 = vmatprep.subr.mxu0 0.0
    %410 = vmatpush1.msra.mxu0 %v361
    %411 = vmatprep.subr.mxu0 0.0
    %412 = vmatpush1.msra.mxu0 %v362
    %413 = vmatprep.subr.mxu0 0.0
    %414 = vmatpush1.msra.mxu0 %v363
    %415 = vmatprep.subr.mxu0 0.0
    %416 = vmatpush1.msra.mxu0 %v364
    %417 = vmatprep.subr.mxu0 0.0
    %418 = vmatpush1.msra.mxu0 %v365
    %419 = vmatprep.subr.mxu0 0.0
    %420 = vmatpush1.msra.mxu0 %v366
    %421 = vmatprep.subr.mxu0 0.0
    %422 = vmatpush1.msra.mxu0 %v367
    %423 = vmatprep.subr.mxu0 0.0
    %424 = vmatpush1.msra.mxu0 %v368
    %425 = vmatprep.subr.mxu0 0.0
    %426 = vmatpush1.msra.mxu0 %v369
    %427 = vmatprep.subr.mxu0 0.0
    %428 = vmatpush1.msra.mxu0 %v370
    %429 = vmatprep.subr.mxu0 0.0
    %430 = vmatpush1.msra.mxu0 %v371
    %431 = vmatprep.subr.mxu0 0.0
    %432 = vmatpush1.msra.mxu0 %v372
    %433 = vmatprep.subr.mxu0 0.0
    %434 = vmatpush1.msra.mxu0 %v373
    %435 = vmatprep.subr.mxu0 0.0
    %436 = vmatpush1.msra.mxu0 %v374
    %437 = vmatprep.subr.mxu0 0.0
    %438 = vmatpush1.msra.mxu0 %v375
    %439 = vmatprep.subr.mxu0 0.0
    %440 = vmatpush1.msra.mxu0 %v376
    %441 = vmatprep.subr.mxu0 0.0
    %442 = vmatpush1.msra.mxu0 %v377
    %443 = vmatprep.subr.mxu0 0.0
    %444 = vmatpush1.msra.mxu0 %v378
    %445 = vmatprep.subr.mxu0 0.0
    %446 = vmatpush1.msra.mxu0 %v379
    %447 = vmatprep.subr.mxu0 0.0
    %448 = vmatpush1.msra.mxu0 %v380
    %449 = vmatprep.subr.mxu0 0.0
    %450 = vmatpush1.msra.mxu0 %v381
    %451 = vmatprep.subr.mxu0 0.0
    %452 = vmatpush1.msra.mxu0 %v382
    %453 = vmatprep.subr.mxu0 0.0
    %454 = vmatpush1.msra.mxu0 %v383
    %455 = vmatprep.mubr.f32.mxu0 %v351
    %456 = vmatmul.mubr.f32.gmra.mrb[0].mxu0 %v350
    %v457 = vpop.f32.mrb[0].mxu0
    %v458 = vadd.f32 %v389, %v457
    %v459 = vpop.f32.mrb[0].mxu0
    %460 = vdwg.mxu0
    %461 = vst [vmem:[#allocation8] sm:$0xf] %v458
    // Predicated region
    $region34: #{tpu_custom_call.1} parent=1 // pred_check
      _
    $region35: #{tpu_custom_call.1} parent=1 // pred_check_branch
      %463 = sbr.rel (0) target = $region37
    $region36: #{tpu_custom_call.1} parent=1 // pred_region
      %s465 = ssub.s32 64, 64
      %466 = vsyncadd [#allocation4], %s465
      %s468 = sshll.u32 [#allocation8], 4
      %s469 = int_to_ptr.vmem [resolvable:$true] %s468
      %471 = dma.vmem_to_hbm [thread:$0]  %s469, 64, %s5, [#allocation4]
    $region37: #{tpu_custom_call.1} parent=1 // pred_fallthru
      _
    // Predicated region
    $region38: #{tpu_custom_call.1} parent=1 // pred_check
      _
    $region39: #{tpu_custom_call.1} parent=1 // pred_check_branch
      %473 = sbr.rel (0) target = $region41
    $region40: #{tpu_custom_call.1} parent=1 // pred_region
      %474 = dma.done [#allocation4], 64
    $region41: #{tpu_custom_call.1} parent=1 // pred_fallthru
      _
    %475 = vsyncpa [#allocation3], 1
    %476 = vsyncpa [#allocation6], 1
    %477 = vsyncpa [#allocation4], 1

</llo_original>
